<compile_context>
chip_gen: v5e
topology: v5e:2x2
jax: 0.10.0
libtpu: 0.0.40
codegen_flags: <defaults>
</compile_context>

<pallas_src>
import jax
import jax.numpy as jnp
import numpy as np
from jax.experimental import pallas as pl
from jax.experimental.pallas import tpu as pltpu

NEG_CTX = 1    # config.negsamp_ratio_context
NEG_PATCH = 1  # config.negsamp_ratio_patch


def _round_up(x, m):
    return (x + m - 1) // m * m


# --------------------------------------------------------------------------
# Stage 1: B-tiled fused two-view GCN + context readout
# --------------------------------------------------------------------------
def gcn_readout_kernel(bf_ref, ba_ref, w_ref, b_ref, alpha_ref, last_ref, other_ref):
    """Per-B-tile fused GCN for both views.

    bf_ref    : (S, Bt, F)  bf16  node-major features
    ba_ref    : (Bt, S*S)   bf16  flattened dense adjacency (index s*S + t)
    w_ref     : (F, 2H)     bf16  [W_ctx | W_pat]
    b_ref     : (1, 2H)     f32   [b_ctx | b_pat]
    alpha_ref : (1, 2H)     f32   [alpha_ctx * 1_H | alpha_pat * 1_H]
    last_ref  : (Bt, 2H)    f32   out: node S-1 of both views = [h_mv | h_ano]
    other_ref : (Bt, 2H)    f32   out: [avg-readout c | h_un (node S-2, patch view)]
    """
    S, Bt, F = bf_ref.shape
    H2 = w_ref.shape[1]
    H = H2 // 2

    # One fused MXU push for all S nodes and both views (M = S*Bt, N = 2H).
    x2d = jnp.concatenate([bf_ref[t] for t in range(S)], axis=0)            # (S*Bt, F)
    fts = jnp.dot(x2d, w_ref[...], preferred_element_type=jnp.float32)      # (S*Bt, 2H)
    ft_nodes = [fts[t * Bt:(t + 1) * Bt, :] for t in range(S)]              # aligned slices

    adj = ba_ref[...].astype(jnp.float32)            # all VPU math in f32 (v5e-safe)
    bias = jnp.broadcast_to(b_ref[...], (Bt, H2))    # hoisted: one broadcast per tile
    alpha = jnp.broadcast_to(alpha_ref[...], (Bt, H2))

    def node_out(s):
        # output node s of both views: sum_t adj[b, s, t] * ft_t + bias, then PReLU
        acc = adj[:, s * S:s * S + 1] * ft_nodes[0]
        for t in range(1, S):
            acc = acc + adj[:, s * S + t:s * S + t + 1] * ft_nodes[t]
        acc = acc + bias
        return jnp.where(acc > 0, acc, alpha * acc)  # per-lane PReLU (ctx | pat alphas)

    # Accumulate the avg readout on the fly; only nodes S-2 and S-1 stay live.
    # (Computing the patch half for nodes < S-2 is free: 2H <= 128 lanes, same vregs.)
    c_acc = None
    h_sm2 = None
    for s in range(S - 1):
        h_s = node_out(s)
        c_acc = h_s if c_acc is None else c_acc + h_s
        if s == S - 2:
            h_sm2 = h_s
    h_last = node_out(S - 1)

    last_ref[...] = h_last
    other_ref[...] = jnp.concatenate(
        [c_acc[:, :H] * (1.0 / (S - 1)), h_sm2[:, H:]], axis=1)


# --------------------------------------------------------------------------
# Stage 2: bilinear discriminators over the WHOLE batch (handles the
# cross-row negative-sample shift, which cannot be tiled over B)
# --------------------------------------------------------------------------
def disc_kernel(bias_ref, last_ref, other_ref, wbd_ref, l1_ref, l2_ref):
    """bias_ref: (2,) f32 SMEM [b_bil_ctx, b_bil_patch]
       last_ref: (B, 2H) f32 [h_mv | h_ano]; other_ref: (B, 2H) f32 [c | h_un]
       wbd_ref : (2H, 2H) bf16 block-diag(W_bil_ctx, W_bil_patch)
       l1_ref  : (B, 1+NEG_CTX) f32; l2_ref: (B, 1+NEG_PATCH) f32 (column = round)
    """
    B, H2 = last_ref.shape
    H = H2 // 2
    b_c = bias_ref[0]
    b_p = bias_ref[1]

    # Both discriminators in a single MXU call.
    lhs = last_ref[...].astype(jnp.bfloat16)
    prod = jnp.dot(lhs, wbd_ref[...], preferred_element_type=jnp.float32)   # (B, 2H)
    hW, hWp = prod[:, :H], prod[:, H:]
    other = other_ref[...]
    c, h_un = other[:, :H], other[:, H:]

    def shift(x):  # torch.cat((x[-2:-1], x[:-1]), 0)
        return jnp.concatenate([x[B - 2:B - 1, :], x[:B - 1, :]], axis=0)

    cur = c
    l1_ref[:, 0:1] = jnp.sum(hW * cur, axis=-1, keepdims=True) + b_c
    for k in range(NEG_CTX):
        cur = shift(cur)
        l1_ref[:, k + 1:k + 2] = jnp.sum(hW * cur, axis=-1, keepdims=True) + b_c

    cur = h_un
    l2_ref[:, 0:1] = jnp.sum(hWp * cur, axis=-1, keepdims=True) + b_p
    for k in range(NEG_PATCH):
        cur = shift(cur)
        l2_ref[:, k + 1:k + 2] = jnp.sum(hWp * cur, axis=-1, keepdims=True) + b_p


# --------------------------------------------------------------------------
# Wrapper
# --------------------------------------------------------------------------
def anemone_forward(bf, ba, params, *, block_b=256):
    B, S, F = bf.shape
    H = params["w_ctx"].shape[1]
    H2 = 2 * H
    f32, b16 = jnp.float32, jnp.bfloat16

    # --- fold parameters for the fused kernels (tiny, one-time) ---
    w_cat = jnp.concatenate([params["w_ctx"], params["w_pat"]], axis=1).astype(b16)  # (F, 2H)
    b_cat = jnp.concatenate([params["b_ctx"], params["b_pat"]], axis=1).astype(f32)  # (1, 2H)
    a_cat = jnp.concatenate(
        [jnp.full((1, H), params["a_ctx"], f32),
         jnp.full((1, H), params["a_pat"], f32)], axis=1)                            # (1, 2H)
    w_bd = jnp.zeros((H2, H2), f32)
    w_bd = w_bd.at[:H, :H].set(params["w_bil_c"]).at[H:, H:].set(params["w_bil_p"])
    w_bd = w_bd.astype(b16)                                                          # (2H, 2H)
    bias_bil = jnp.stack([jnp.asarray(params["b_bil_c"], f32),
                          jnp.asarray(params["b_bil_p"], f32)])                      # (2,)

    # --- layout plumbing (fuses with the bf16 cast in XLA) ---
    Bt = _round_up(min(block_b, _round_up(B, 8)), 8)
    B_pad = _round_up(B, Bt)
    bf_nm = jnp.transpose(bf, (1, 0, 2)).astype(b16)      # (S, B, F) node-major
    ba2d = jnp.reshape(ba, (B, S * S)).astype(b16)        # (B, S*S)
    if B_pad != B:
        bf_nm = jnp.pad(bf_nm, ((0, 0), (0, B_pad - B), (0, 0)))
        ba2d = jnp.pad(ba2d, ((0, B_pad - B), (0, 0)))

    last, other = pl.pallas_call(
        gcn_readout_kernel,
        out_shape=(jax.ShapeDtypeStruct((B_pad, H2), f32),
                   jax.ShapeDtypeStruct((B_pad, H2), f32)),
        grid=(B_pad // Bt,),
        in_specs=[
            pl.BlockSpec((S, Bt, F), lambda i: (0, i, 0)),   # features (node-major)
            pl.BlockSpec((Bt, S * S), lambda i: (i, 0)),     # adjacency
            pl.BlockSpec((F, H2), lambda i: (0, 0)),         # fused weights (resident)
            pl.BlockSpec((1, H2), lambda i: (0, 0)),         # fused bias
            pl.BlockSpec((1, H2), lambda i: (0, 0)),         # fused PReLU alphas
        ],
        out_specs=(
            pl.BlockSpec((Bt, H2), lambda i: (i, 0)),
            pl.BlockSpec((Bt, H2), lambda i: (i, 0)),
        ),
        compiler_params=pltpu.CompilerParams(
            dimension_semantics=("parallel",),      # megacore-shardable on v7x
            vmem_limit_bytes=48 * 1024 * 1024,      # fits v7x's 64 MiB, > 32 MiB default
        ),
    )(bf_nm, ba2d, w_cat, b_cat, a_cat)

    last = last[:B]
    other = other[:B]

    vmem = pl.BlockSpec(memory_space=pltpu.MemorySpace.VMEM)
    smem = pl.BlockSpec(memory_space=pltpu.MemorySpace.SMEM)
    l1, l2 = pl.pallas_call(
        disc_kernel,
        out_shape=(jax.ShapeDtypeStruct((B, 1 + NEG_CTX), f32),
                   jax.ShapeDtypeStruct((B, 1 + NEG_PATCH), f32)),
        in_specs=[smem, vmem, vmem, vmem],
        out_specs=(vmem, vmem),
    )(bias_bil, last, other, w_bd)

    # round-major ((1+neg)*B, 1) ordering, matching torch.cat along dim 0
    return jnp.transpose(l1).reshape(-1, 1), jnp.transpose(l2).reshape(-1, 1)


# --------------------------------------------------------------------------
# Pure-JAX reference mirroring the PyTorch graph (and the kernel's numerics:
# bf16 MXU operands, f32 accumulation / elementwise math).
# --------------------------------------------------------------------------
def ref_forward(bf, ba, p):
    def gcn(w, b, a):
        fts = jnp.einsum("bsf,fh->bsh", bf, w)
        # explicit f32 broadcast-sum == kernel's f32 VPU aggregation
        out = jnp.sum(ba[:, :, :, None] * fts[:, None, :, :], axis=2) + b
        return jnp.where(out > 0, out, a * out)

    h1 = gcn(p["w_ctx"], p["b_ctx"], p["a_ctx"])
    h2 = gcn(p["w_pat"], p["b_pat"], p["a_pat"])
    c = jnp.mean(h1[:, :-1, :], axis=1)
    h_mv = h1[:, -1, :]

    def bilinear(x1, x2, W, b):
        x1q = x1.astype(jnp.bfloat16).astype(jnp.float32)
        Wq = W.astype(jnp.bfloat16).astype(jnp.float32)
        return jnp.sum((x1q @ Wq) * x2, axis=-1, keepdims=True) + b

    l1 = [bilinear(h_mv, c, p["w_bil_c"], p["b_bil_c"])]
    c_mi = c
    for _ in range(NEG_CTX):
        c_mi = jnp.concatenate([c_mi[-2:-1], c_mi[:-1]], 0)
        l1.append(bilinear(h_mv, c_mi, p["w_bil_c"], p["b_bil_c"]))
    l2 = [bilinear(h2[:, -1], h2[:, -2], p["w_bil_p"], p["b_bil_p"])]
    h_mi = h2[:, -2]
    for _ in range(NEG_PATCH):
        h_mi = jnp.concatenate([h_mi[-2:-1], h_mi[:-1]], 0)
        l2.append(bilinear(h2[:, -1], h_mi, p["w_bil_p"], p["b_bil_p"]))
    return jnp.concatenate(l1, 0), jnp.concatenate(l2, 0)


def _xavier(key, shape):
    fan_in, fan_out = shape[0], shape[1]
    bound = float(np.sqrt(6.0 / (fan_in + fan_out)))
    return jax.random.uniform(key, shape, jnp.float32, -bound, bound)


if __name__ == "__main__":
    # small shapes consistent with the module: batch of subgraphs, subgraph_size=4
    B, S, F, H = 8, 4, 16, 32

    key = jax.random.PRNGKey(0)
    k_bf, k_ba, k1, k2, k3, k4, k5, k6 = jax.random.split(key, 8)

    bf = jax.random.normal(k_bf, (B, S, F), jnp.float32)
    ba = jax.random.uniform(k_ba, (B, S, S), jnp.float32)  # dense subgraph adjacency

    params = {
        # GCN (context / patch): Linear weight xavier, bias, PReLU alpha
        "w_ctx": _xavier(k1, (F, H)),
        "b_ctx": 0.05 * jax.random.normal(k5, (1, H), jnp.float32),
        "a_ctx": 0.25,
        "w_pat": _xavier(k2, (F, H)),
        "b_pat": 0.05 * jax.random.normal(k6, (1, H), jnp.float32),
        "a_pat": 0.30,
        # Bilinear discriminators
        "w_bil_c": _xavier(k3, (H, H)),
        "b_bil_c": 0.1,
        "w_bil_p": _xavier(k4, (H, H)),
        "b_bil_p": -0.05,
    }

    fwd = jax.jit(anemone_forward)
    logits_1, logits_2 = jax.block_until_ready(fwd(bf, ba, params))

    # reference on the same bf16-quantized MXU inputs the kernel consumes
    pq = dict(params)
    pq["w_ctx"] = params["w_ctx"].astype(jnp.bfloat16).astype(jnp.float32)
    pq["w_pat"] = params["w_pat"].astype(jnp.bfloat16).astype(jnp.float32)
    bfq = bf.astype(jnp.bfloat16).astype(jnp.float32)
    baq = ba.astype(jnp.bfloat16).astype(jnp.float32)
    ref_1, ref_2 = ref_forward(bfq, baq, pq)

    np.testing.assert_allclose(np.asarray(logits_1), np.asarray(ref_1), rtol=1e-3, atol=5e-2)
    np.testing.assert_allclose(np.asarray(logits_2), np.asarray(ref_2), rtol=1e-3, atol=5e-2)
    assert logits_1.shape == ((1 + NEG_CTX) * B, 1)
    assert logits_2.shape == ((1 + NEG_PATCH) * B, 1)

    print("KERNEL_OK")
</pallas_src>

<mosaic_0001>
module attributes {stable_mosaic.version = 11 : i64} {
  func.func @gcn_readout_kernel(%arg0: i32, %arg1: memref<4x8x16xbf16, #tpu.memory_space<vmem>>, %arg2: memref<8x16xbf16, #tpu.memory_space<vmem>>, %arg3: memref<16x64xbf16, #tpu.memory_space<vmem>>, %arg4: memref<1x64xf32, #tpu.memory_space<vmem>>, %arg5: memref<1x64xf32, #tpu.memory_space<vmem>>, %arg6: memref<8x64xf32, #tpu.memory_space<vmem>>, %arg7: memref<8x64xf32, #tpu.memory_space<vmem>>) attributes {dimension_semantics = [#tpu.dimension_semantics<parallel>], iteration_bounds = array<i64: 1>, scalar_prefetch = 0 : i64, scratch_operands = 0 : i64, tpu.core_type = #tpu.core_type<tc>, window_params = [{transform_indices = @transform_0, window_bounds = array<i64: 4, 8, 16>}, {transform_indices = @transform_1, window_bounds = array<i64: 8, 16>}, {pipeline_mode = #tpu.pipeline_mode<synchronous>, transform_indices = @transform_2, window_bounds = array<i64: 16, 64>}, {pipeline_mode = #tpu.pipeline_mode<synchronous>, transform_indices = @transform_3, window_bounds = array<i64: 1, 64>}, {pipeline_mode = #tpu.pipeline_mode<synchronous>, transform_indices = @transform_4, window_bounds = array<i64: 1, 64>}, {transform_indices = @transform_5, window_bounds = array<i64: 8, 64>}, {transform_indices = @transform_6, window_bounds = array<i64: 8, 64>}]} {
    %c0 = arith.constant 0 : index
    %c0_0 = arith.constant 0 : index
    %c0_1 = arith.constant 0 : index
    %0 = vector.load %arg1[%c0, %c0_0, %c0_1] : memref<4x8x16xbf16, #tpu.memory_space<vmem>>, vector<1x8x16xbf16>
    %1 = vector.shape_cast %0 : vector<1x8x16xbf16> to vector<8x16xbf16>
    %c1 = arith.constant 1 : index
    %c0_2 = arith.constant 0 : index
    %c0_3 = arith.constant 0 : index
    %2 = vector.load %arg1[%c1, %c0_2, %c0_3] : memref<4x8x16xbf16, #tpu.memory_space<vmem>>, vector<1x8x16xbf16>
    %3 = vector.shape_cast %2 : vector<1x8x16xbf16> to vector<8x16xbf16>
    %c2 = arith.constant 2 : index
    %c0_4 = arith.constant 0 : index
    %c0_5 = arith.constant 0 : index
    %4 = vector.load %arg1[%c2, %c0_4, %c0_5] : memref<4x8x16xbf16, #tpu.memory_space<vmem>>, vector<1x8x16xbf16>
    %5 = vector.shape_cast %4 : vector<1x8x16xbf16> to vector<8x16xbf16>
    %c3 = arith.constant 3 : index
    %c0_6 = arith.constant 0 : index
    %c0_7 = arith.constant 0 : index
    %6 = vector.load %arg1[%c3, %c0_6, %c0_7] : memref<4x8x16xbf16, #tpu.memory_space<vmem>>, vector<1x8x16xbf16>
    %7 = vector.shape_cast %6 : vector<1x8x16xbf16> to vector<8x16xbf16>
    %8 = tpu.concatenate %1, %3, %5, %7 in 0 : vector<8x16xbf16>, vector<8x16xbf16>, vector<8x16xbf16>, vector<8x16xbf16> -> vector<32x16xbf16>
    %c0_8 = arith.constant 0 : index
    %c0_9 = arith.constant 0 : index
    %9 = vector.load %arg3[%c0_8, %c0_9] : memref<16x64xbf16, #tpu.memory_space<vmem>>, vector<16x64xbf16>
    %cst = arith.constant dense<0.000000e+00> : vector<32x64xf32>
    %10 = tpu.matmul %8, %9, %cst {dimension_numbers = #tpu.dot_dimension_numbers<[1], [0], [0], [1], [0, 0, 1, 1], [], []>} : vector<32x16xbf16>, vector<16x64xbf16>, vector<32x64xf32> -> vector<32x64xf32>
    %11 = vector.extract_strided_slice %10 {offsets = [0, 0], sizes = [8, 64], strides = [1, 1]} : vector<32x64xf32> to vector<8x64xf32>
    %12 = vector.extract_strided_slice %10 {offsets = [8, 0], sizes = [8, 64], strides = [1, 1]} : vector<32x64xf32> to vector<8x64xf32>
    %13 = vector.extract_strided_slice %10 {offsets = [16, 0], sizes = [8, 64], strides = [1, 1]} : vector<32x64xf32> to vector<8x64xf32>
    %14 = vector.extract_strided_slice %10 {offsets = [24, 0], sizes = [8, 64], strides = [1, 1]} : vector<32x64xf32> to vector<8x64xf32>
    %c0_10 = arith.constant 0 : index
    %c0_11 = arith.constant 0 : index
    %15 = vector.load %arg2[%c0_10, %c0_11] : memref<8x16xbf16, #tpu.memory_space<vmem>>, vector<8x16xbf16>
    %16 = arith.extf %15 : vector<8x16xbf16> to vector<8x16xf32>
    %c0_12 = arith.constant 0 : index
    %c0_13 = arith.constant 0 : index
    %17 = vector.load %arg4[%c0_12, %c0_13] : memref<1x64xf32, #tpu.memory_space<vmem>>, vector<1x64xf32>
    %18 = vector.shape_cast %17 : vector<1x64xf32> to vector<1x64xf32>
    %19 = vector.broadcast %18 : vector<1x64xf32> to vector<8x64xf32>
    %c0_14 = arith.constant 0 : index
    %c0_15 = arith.constant 0 : index
    %20 = vector.load %arg5[%c0_14, %c0_15] : memref<1x64xf32, #tpu.memory_space<vmem>>, vector<1x64xf32>
    %21 = vector.shape_cast %20 : vector<1x64xf32> to vector<1x64xf32>
    %22 = vector.broadcast %21 : vector<1x64xf32> to vector<8x64xf32>
    %23 = vector.extract_strided_slice %16 {offsets = [0, 0], sizes = [8, 1], strides = [1, 1]} : vector<8x16xf32> to vector<8x1xf32>
    %24 = vector.broadcast %23 : vector<8x1xf32> to vector<8x64xf32>
    %25 = arith.mulf %24, %11 : vector<8x64xf32>
    %26 = vector.extract_strided_slice %16 {offsets = [0, 1], sizes = [8, 1], strides = [1, 1]} : vector<8x16xf32> to vector<8x1xf32>
    %27 = vector.broadcast %26 : vector<8x1xf32> to vector<8x64xf32>
    %28 = arith.mulf %27, %12 : vector<8x64xf32>
    %29 = arith.addf %25, %28 : vector<8x64xf32>
    %30 = vector.extract_strided_slice %16 {offsets = [0, 2], sizes = [8, 1], strides = [1, 1]} : vector<8x16xf32> to vector<8x1xf32>
    %31 = vector.broadcast %30 : vector<8x1xf32> to vector<8x64xf32>
    %32 = arith.mulf %31, %13 : vector<8x64xf32>
    %33 = arith.addf %29, %32 : vector<8x64xf32>
    %34 = vector.extract_strided_slice %16 {offsets = [0, 3], sizes = [8, 1], strides = [1, 1]} : vector<8x16xf32> to vector<8x1xf32>
    %35 = vector.broadcast %34 : vector<8x1xf32> to vector<8x64xf32>
    %36 = arith.mulf %35, %14 : vector<8x64xf32>
    %37 = arith.addf %33, %36 : vector<8x64xf32>
    %38 = arith.addf %37, %19 : vector<8x64xf32>
    %cst_16 = arith.constant 0.000000e+00 : f32
    %39 = vector.broadcast %cst_16 : f32 to vector<8x64xf32>
    %40 = arith.cmpf ogt, %38, %39 : vector<8x64xf32>
    %41 = arith.mulf %22, %38 : vector<8x64xf32>
    %42 = arith.select %40, %38, %41 : vector<8x64xi1>, vector<8x64xf32>
    %43 = vector.extract_strided_slice %16 {offsets = [0, 4], sizes = [8, 1], strides = [1, 1]} : vector<8x16xf32> to vector<8x1xf32>
    %44 = vector.broadcast %43 : vector<8x1xf32> to vector<8x64xf32>
    %45 = arith.mulf %44, %11 : vector<8x64xf32>
    %46 = vector.extract_strided_slice %16 {offsets = [0, 5], sizes = [8, 1], strides = [1, 1]} : vector<8x16xf32> to vector<8x1xf32>
    %47 = vector.broadcast %46 : vector<8x1xf32> to vector<8x64xf32>
    %48 = arith.mulf %47, %12 : vector<8x64xf32>
    %49 = arith.addf %45, %48 : vector<8x64xf32>
    %50 = vector.extract_strided_slice %16 {offsets = [0, 6], sizes = [8, 1], strides = [1, 1]} : vector<8x16xf32> to vector<8x1xf32>
    %51 = vector.broadcast %50 : vector<8x1xf32> to vector<8x64xf32>
    %52 = arith.mulf %51, %13 : vector<8x64xf32>
    %53 = arith.addf %49, %52 : vector<8x64xf32>
    %54 = vector.extract_strided_slice %16 {offsets = [0, 7], sizes = [8, 1], strides = [1, 1]} : vector<8x16xf32> to vector<8x1xf32>
    %55 = vector.broadcast %54 : vector<8x1xf32> to vector<8x64xf32>
    %56 = arith.mulf %55, %14 : vector<8x64xf32>
    %57 = arith.addf %53, %56 : vector<8x64xf32>
    %58 = arith.addf %57, %19 : vector<8x64xf32>
    %cst_17 = arith.constant 0.000000e+00 : f32
    %59 = vector.broadcast %cst_17 : f32 to vector<8x64xf32>
    %60 = arith.cmpf ogt, %58, %59 : vector<8x64xf32>
    %61 = arith.mulf %22, %58 : vector<8x64xf32>
    %62 = arith.select %60, %58, %61 : vector<8x64xi1>, vector<8x64xf32>
    %63 = arith.addf %42, %62 : vector<8x64xf32>
    %64 = vector.extract_strided_slice %16 {offsets = [0, 8], sizes = [8, 1], strides = [1, 1]} : vector<8x16xf32> to vector<8x1xf32>
    %65 = vector.broadcast %64 : vector<8x1xf32> to vector<8x64xf32>
    %66 = arith.mulf %65, %11 : vector<8x64xf32>
    %67 = vector.extract_strided_slice %16 {offsets = [0, 9], sizes = [8, 1], strides = [1, 1]} : vector<8x16xf32> to vector<8x1xf32>
    %68 = vector.broadcast %67 : vector<8x1xf32> to vector<8x64xf32>
    %69 = arith.mulf %68, %12 : vector<8x64xf32>
    %70 = arith.addf %66, %69 : vector<8x64xf32>
    %71 = vector.extract_strided_slice %16 {offsets = [0, 10], sizes = [8, 1], strides = [1, 1]} : vector<8x16xf32> to vector<8x1xf32>
    %72 = vector.broadcast %71 : vector<8x1xf32> to vector<8x64xf32>
    %73 = arith.mulf %72, %13 : vector<8x64xf32>
    %74 = arith.addf %70, %73 : vector<8x64xf32>
    %75 = vector.extract_strided_slice %16 {offsets = [0, 11], sizes = [8, 1], strides = [1, 1]} : vector<8x16xf32> to vector<8x1xf32>
    %76 = vector.broadcast %75 : vector<8x1xf32> to vector<8x64xf32>
    %77 = arith.mulf %76, %14 : vector<8x64xf32>
    %78 = arith.addf %74, %77 : vector<8x64xf32>
    %79 = arith.addf %78, %19 : vector<8x64xf32>
    %cst_18 = arith.constant 0.000000e+00 : f32
    %80 = vector.broadcast %cst_18 : f32 to vector<8x64xf32>
    %81 = arith.cmpf ogt, %79, %80 : vector<8x64xf32>
    %82 = arith.mulf %22, %79 : vector<8x64xf32>
    %83 = arith.select %81, %79, %82 : vector<8x64xi1>, vector<8x64xf32>
    %84 = arith.addf %63, %83 : vector<8x64xf32>
    %85 = vector.extract_strided_slice %16 {offsets = [0, 12], sizes = [8, 1], strides = [1, 1]} : vector<8x16xf32> to vector<8x1xf32>
    %86 = vector.broadcast %85 : vector<8x1xf32> to vector<8x64xf32>
    %87 = arith.mulf %86, %11 : vector<8x64xf32>
    %88 = vector.extract_strided_slice %16 {offsets = [0, 13], sizes = [8, 1], strides = [1, 1]} : vector<8x16xf32> to vector<8x1xf32>
    %89 = vector.broadcast %88 : vector<8x1xf32> to vector<8x64xf32>
    %90 = arith.mulf %89, %12 : vector<8x64xf32>
    %91 = arith.addf %87, %90 : vector<8x64xf32>
    %92 = vector.extract_strided_slice %16 {offsets = [0, 14], sizes = [8, 1], strides = [1, 1]} : vector<8x16xf32> to vector<8x1xf32>
    %93 = vector.broadcast %92 : vector<8x1xf32> to vector<8x64xf32>
    %94 = arith.mulf %93, %13 : vector<8x64xf32>
    %95 = arith.addf %91, %94 : vector<8x64xf32>
    %96 = vector.extract_strided_slice %16 {offsets = [0, 15], sizes = [8, 1], strides = [1, 1]} : vector<8x16xf32> to vector<8x1xf32>
    %97 = vector.broadcast %96 : vector<8x1xf32> to vector<8x64xf32>
    %98 = arith.mulf %97, %14 : vector<8x64xf32>
    %99 = arith.addf %95, %98 : vector<8x64xf32>
    %100 = arith.addf %99, %19 : vector<8x64xf32>
    %cst_19 = arith.constant 0.000000e+00 : f32
    %101 = vector.broadcast %cst_19 : f32 to vector<8x64xf32>
    %102 = arith.cmpf ogt, %100, %101 : vector<8x64xf32>
    %103 = arith.mulf %22, %100 : vector<8x64xf32>
    %104 = arith.select %102, %100, %103 : vector<8x64xi1>, vector<8x64xf32>
    %c0_20 = arith.constant 0 : index
    %c0_21 = arith.constant 0 : index
    %105 = vector.load %arg6[%c0_20, %c0_21] : memref<8x64xf32, #tpu.memory_space<vmem>>, vector<8x64xf32>
    tpu.vector_store %arg6[%c0_20, %c0_21], %104 {strides = array<i32>} : memref<8x64xf32, #tpu.memory_space<vmem>>, vector<8x64xf32>,
    %106 = vector.extract_strided_slice %84 {offsets = [0, 0], sizes = [8, 32], strides = [1, 1]} : vector<8x64xf32> to vector<8x32xf32>
    %cst_22 = arith.constant 0.333333343 : f32
    %107 = vector.broadcast %cst_22 : f32 to vector<8x32xf32>
    %108 = arith.mulf %106, %107 : vector<8x32xf32>
    %109 = vector.extract_strided_slice %83 {offsets = [0, 32], sizes = [8, 32], strides = [1, 1]} : vector<8x64xf32> to vector<8x32xf32>
    %110 = tpu.concatenate %108, %109 in 1 : vector<8x32xf32>, vector<8x32xf32> -> vector<8x64xf32>
    %c0_23 = arith.constant 0 : index
    %c0_24 = arith.constant 0 : index
    %111 = vector.load %arg7[%c0_23, %c0_24] : memref<8x64xf32, #tpu.memory_space<vmem>>, vector<8x64xf32>
    tpu.vector_store %arg7[%c0_23, %c0_24], %110 {strides = array<i32>} : memref<8x64xf32, #tpu.memory_space<vmem>>, vector<8x64xf32>,
    return
  }
  func.func @transform_0(%arg0: i32) -> (i32, i32, i32) {
    %c0_i32 = arith.constant 0 : i32
    %c0_i32_0 = arith.constant 0 : i32
    %c0_i32_1 = arith.constant 0 : i32
    return %c0_i32, %arg0, %c0_i32_0 : i32, i32, i32
  }
  func.func @transform_1(%arg0: i32) -> (i32, i32) {
    %c0_i32 = arith.constant 0 : i32
    %c0_i32_0 = arith.constant 0 : i32
    return %arg0, %c0_i32 : i32, i32
  }
  func.func @transform_2(%arg0: i32) -> (i32, i32) {
    %c0_i32 = arith.constant 0 : i32
    %c0_i32_0 = arith.constant 0 : i32
    %c0_i32_1 = arith.constant 0 : i32
    return %c0_i32, %c0_i32_0 : i32, i32
  }
  func.func @transform_3(%arg0: i32) -> (i32, i32) {
    %c0_i32 = arith.constant 0 : i32
    %c0_i32_0 = arith.constant 0 : i32
    %c0_i32_1 = arith.constant 0 : i32
    return %c0_i32, %c0_i32_0 : i32, i32
  }
  func.func @transform_4(%arg0: i32) -> (i32, i32) {
    %c0_i32 = arith.constant 0 : i32
    %c0_i32_0 = arith.constant 0 : i32
    %c0_i32_1 = arith.constant 0 : i32
    return %c0_i32, %c0_i32_0 : i32, i32
  }
  func.func @transform_5(%arg0: i32) -> (i32, i32) {
    %c0_i32 = arith.constant 0 : i32
    %c0_i32_0 = arith.constant 0 : i32
    return %arg0, %c0_i32 : i32, i32
  }
  func.func @transform_6(%arg0: i32) -> (i32, i32) {
    %c0_i32 = arith.constant 0 : i32
    %c0_i32_0 = arith.constant 0 : i32
    return %arg0, %c0_i32 : i32, i32
  }
}

module attributes {stable_mosaic.version = 11 : i64} {
  func.func @disc_kernel(%arg0: memref<2xf32, #tpu.memory_space<smem>>, %arg1: memref<8x64xf32, #tpu.memory_space<vmem>>, %arg2: memref<8x64xf32, #tpu.memory_space<vmem>>, %arg3: memref<64x64xbf16, #tpu.memory_space<vmem>>, %arg4: memref<8x2xf32, #tpu.memory_space<vmem>>, %arg5: memref<8x2xf32, #tpu.memory_space<vmem>>) attributes {dimension_semantics = [], scalar_prefetch = 0 : i64, scratch_operands = 0 : i64, tpu.core_type = #tpu.core_type<tc>} {
    %c0 = arith.constant 0 : index
    %0 = memref.load %arg0[%c0] : memref<2xf32, #tpu.memory_space<smem>>
    %c1 = arith.constant 1 : index
    %1 = memref.load %arg0[%c1] : memref<2xf32, #tpu.memory_space<smem>>
    %c0_0 = arith.constant 0 : index
    %c0_1 = arith.constant 0 : index
    %2 = vector.load %arg1[%c0_0, %c0_1] : memref<8x64xf32, #tpu.memory_space<vmem>>, vector<8x64xf32>
    %3 = arith.truncf %2 : vector<8x64xf32> to vector<8x64xbf16>
    %c0_2 = arith.constant 0 : index
    %c0_3 = arith.constant 0 : index
    %4 = vector.load %arg3[%c0_2, %c0_3] : memref<64x64xbf16, #tpu.memory_space<vmem>>, vector<64x64xbf16>
    %cst = arith.constant dense<0.000000e+00> : vector<8x64xf32>
    %5 = tpu.matmul %3, %4, %cst {dimension_numbers = #tpu.dot_dimension_numbers<[1], [0], [0], [1], [0, 0, 1, 1], [], []>} : vector<8x64xbf16>, vector<64x64xbf16>, vector<8x64xf32> -> vector<8x64xf32>
    %6 = vector.extract_strided_slice %5 {offsets = [0, 0], sizes = [8, 32], strides = [1, 1]} : vector<8x64xf32> to vector<8x32xf32>
    %7 = vector.extract_strided_slice %5 {offsets = [0, 32], sizes = [8, 32], strides = [1, 1]} : vector<8x64xf32> to vector<8x32xf32>
    %c0_4 = arith.constant 0 : index
    %c0_5 = arith.constant 0 : index
    %8 = vector.load %arg2[%c0_4, %c0_5] : memref<8x64xf32, #tpu.memory_space<vmem>>, vector<8x64xf32>
    %9 = vector.extract_strided_slice %8 {offsets = [0, 0], sizes = [8, 32], strides = [1, 1]} : vector<8x64xf32> to vector<8x32xf32>
    %10 = vector.extract_strided_slice %8 {offsets = [0, 32], sizes = [8, 32], strides = [1, 1]} : vector<8x64xf32> to vector<8x32xf32>
    %11 = arith.mulf %6, %9 : vector<8x32xf32>
    %cst_6 = arith.constant dense<0.000000e+00> : vector<8xf32>
    %12 = vector.multi_reduction <add>, %11, %cst_6 [1] : vector<8x32xf32> to vector<8xf32>
    %13 = vector.shape_cast %12 : vector<8xf32> to vector<8x1xf32>
    %14 = vector.broadcast %0 : f32 to vector<8x1xf32>
    %15 = arith.addf %13, %14 : vector<8x1xf32>
    %c0_7 = arith.constant 0 : index
    %c0_8 = arith.constant 0 : index
    %16 = vector.load %arg4[%c0_7, %c0_8] : memref<8x2xf32, #tpu.memory_space<vmem>>, vector<8x1xf32>
    tpu.vector_store %arg4[%c0_7, %c0_8], %15 {strides = array<i32>} : memref<8x2xf32, #tpu.memory_space<vmem>>, vector<8x1xf32>,
    %17 = vector.extract_strided_slice %9 {offsets = [6, 0], sizes = [1, 32], strides = [1, 1]} : vector<8x32xf32> to vector<1x32xf32>
    %18 = vector.extract_strided_slice %9 {offsets = [0, 0], sizes = [7, 32], strides = [1, 1]} : vector<8x32xf32> to vector<7x32xf32>
    %19 = tpu.concatenate %17, %18 in 0 : vector<1x32xf32>, vector<7x32xf32> -> vector<8x32xf32>
    %20 = arith.mulf %6, %19 : vector<8x32xf32>
    %cst_9 = arith.constant dense<0.000000e+00> : vector<8xf32>
    %21 = vector.multi_reduction <add>, %20, %cst_9 [1] : vector<8x32xf32> to vector<8xf32>
    %22 = vector.shape_cast %21 : vector<8xf32> to vector<8x1xf32>
    %23 = vector.broadcast %0 : f32 to vector<8x1xf32>
    %24 = arith.addf %22, %23 : vector<8x1xf32>
    %c0_10 = arith.constant 0 : index
    %c1_11 = arith.constant 1 : index
    %25 = vector.load %arg4[%c0_10, %c1_11] : memref<8x2xf32, #tpu.memory_space<vmem>>, vector<8x1xf32>
    tpu.vector_store %arg4[%c0_10, %c1_11], %24 {strides = array<i32>} : memref<8x2xf32, #tpu.memory_space<vmem>>, vector<8x1xf32>,
    %26 = arith.mulf %7, %10 : vector<8x32xf32>
    %cst_12 = arith.constant dense<0.000000e+00> : vector<8xf32>
    %27 = vector.multi_reduction <add>, %26, %cst_12 [1] : vector<8x32xf32> to vector<8xf32>
    %28 = vector.shape_cast %27 : vector<8xf32> to vector<8x1xf32>
    %29 = vector.broadcast %1 : f32 to vector<8x1xf32>
    %30 = arith.addf %28, %29 : vector<8x1xf32>
    %c0_13 = arith.constant 0 : index
    %c0_14 = arith.constant 0 : index
    %31 = vector.load %arg5[%c0_13, %c0_14] : memref<8x2xf32, #tpu.memory_space<vmem>>, vector<8x1xf32>
    tpu.vector_store %arg5[%c0_13, %c0_14], %30 {strides = array<i32>} : memref<8x2xf32, #tpu.memory_space<vmem>>, vector<8x1xf32>,
    %32 = vector.extract_strided_slice %10 {offsets = [6, 0], sizes = [1, 32], strides = [1, 1]} : vector<8x32xf32> to vector<1x32xf32>
    %33 = vector.extract_strided_slice %10 {offsets = [0, 0], sizes = [7, 32], strides = [1, 1]} : vector<8x32xf32> to vector<7x32xf32>
    %34 = tpu.concatenate %32, %33 in 0 : vector<1x32xf32>, vector<7x32xf32> -> vector<8x32xf32>
    %35 = arith.mulf %7, %34 : vector<8x32xf32>
    %cst_15 = arith.constant dense<0.000000e+00> : vector<8xf32>
    %36 = vector.multi_reduction <add>, %35, %cst_15 [1] : vector<8x32xf32> to vector<8xf32>
    %37 = vector.shape_cast %36 : vector<8xf32> to vector<8x1xf32>
    %38 = vector.broadcast %1 : f32 to vector<8x1xf32>
    %39 = arith.addf %37, %38 : vector<8x1xf32>
    %c0_16 = arith.constant 0 : index
    %c1_17 = arith.constant 1 : index
    %40 = vector.load %arg5[%c0_16, %c1_17] : memref<8x2xf32, #tpu.memory_space<vmem>>, vector<8x1xf32>
    tpu.vector_store %arg5[%c0_16, %c1_17], %39 {strides = array<i32>} : memref<8x2xf32, #tpu.memory_space<vmem>>, vector<8x1xf32>,
    return
  }
}

</mosaic_0001>

<llo_original>
// kernel: anemone_forward.3
$region0: #{anemone_forward.3}
  #allocation0 [shape = 'u32[]', space=smem, size = 0x4, offset = 0x4, fixed_abs, tag = 'smem constant byte address 0x4 - core index']
  #allocation1 [shape = 'u32[72,128]{1,0:T(1,128)}', space=vmem, size = 0x9000, scoped, tag = 'internal scratch']
  %s0 = inlined_call_operand.vmem [shape: f32[2], index: 0, kind: input, shape index: {}]
  %s1 = inlined_call_operand.vmem [shape: f32[8,64], index: 1, kind: input, shape index: {}]
  %s2 = inlined_call_operand.vmem [shape: f32[8,64], index: 2, kind: input, shape index: {}]
  %s3 = inlined_call_operand.vmem [shape: bf16[64,64], index: 3, kind: input, shape index: {}]
  %s4 = inlined_call_operand.vmem [shape: f32[8,2], index: 4, kind: output, shape index: {0}]
  %s5 = inlined_call_operand.vmem [shape: f32[8,2], index: 5, kind: output, shape index: {1}]
  %6 = xla_tuple %s4, %s5
  %s7 = sld [smem:[#allocation0]]
  $region38: #{anemone_forward.3} parent=0
    _
  %s9 = ssub.s32 1, %s7
  %s10 = scalar_select 0, %s9, %s7
  $region1: #{anemone_forward.3} parent=0
    #allocation2 [shape = 'u8[512]{0}', space=smem, size = 0x200, scoped, tag = 'input window, operand 0, single buffered']
    #allocation3 [shape = 's32[1]{0}', space=sflag, size = 0x4, scoped, tag = 'scoped memory for anemone_forward.3']
    %11 = vsyncpa [#allocation3], 0
    // Predicated region
    $region2: #{anemone_forward.3} parent=1 // pred_check
      _
    $region3: #{anemone_forward.3} parent=1 // pred_check_branch
      %13 = sbr.rel (0) target = $region5
    $region4: #{anemone_forward.3} parent=1 // pred_region
      %15 = vsyncadd [#allocation3], 0
      %s17 = sshll.u32 %s0, 4
      %s18 = int_to_ptr.vmem [resolvable:$true] %s17
      %20 = dma.vmem_to_smem %s18, 16, [#allocation2], [#allocation3]
    $region5: #{anemone_forward.3} parent=1 // pred_fallthru
      _
    // Predicated region
    $region6: #{anemone_forward.3} parent=1 // pred_check
      _
    $region7: #{anemone_forward.3} parent=1 // pred_check_branch
      %22 = sbr.rel (0) target = $region9
    $region8: #{anemone_forward.3} parent=1 // pred_region
      _
    $region9: #{anemone_forward.3} parent=1 // pred_fallthru
      _
    // Predicated region
    $region10: #{anemone_forward.3} parent=1 // pred_check
      _
    $region11: #{anemone_forward.3} parent=1 // pred_check_branch
      %24 = sbr.rel (0) target = $region13
    $region12: #{anemone_forward.3} parent=1 // pred_region
      _
    $region13: #{anemone_forward.3} parent=1 // pred_fallthru
      _
    // Predicated region
    $region14: #{anemone_forward.3} parent=1 // pred_check
      _
    $region15: #{anemone_forward.3} parent=1 // pred_check_branch
      %26 = sbr.rel (0) target = $region17
    $region16: #{anemone_forward.3} parent=1 // pred_region
      _
    $region17: #{anemone_forward.3} parent=1 // pred_fallthru
      _
    // Predicated region
    $region18: #{anemone_forward.3} parent=1 // pred_check
      _
    $region19: #{anemone_forward.3} parent=1 // pred_check_branch
      %28 = sbr.rel (0) target = $region21
    $region20: #{anemone_forward.3} parent=1 // pred_region
      %30 = dma.done [#allocation3], 16
    $region21: #{anemone_forward.3} parent=1 // pred_fallthru
      _
    %31 = sfence
    %s33 = sld [smem:[#allocation2]]
    %s34 = sld [smem:[#allocation2 + $0x1]]
    %v35 = vld [vmem:[%s1] sm:$0xff]
    %v36 = vpack.c.bf16 %v35, %v35
    %v37 = vld [vmem:[%s3] sm:$0xf]
    %v38 = vld [vmem:[%s3 + $0x4] sm:$0xf]
    %v39 = vld [vmem:[%s3 + $0x8] sm:$0xf]
    %v40 = vld [vmem:[%s3 + $0xc] sm:$0xf]
    %v41 = vld [vmem:[%s3 + $0x10] sm:$0xf]
    %v42 = vld [vmem:[%s3 + $0x14] sm:$0xf]
    %v43 = vld [vmem:[%s3 + $0x18] sm:$0xf]
    %v44 = vld [vmem:[%s3 + $0x1c] sm:$0xf]
    %v53 = vunpack.c.l.b16 %v37
    %v54 = vunpack.c.l.b16 %v38
    %v55 = vunpack.c.l.b16 %v39
    %v56 = vunpack.c.l.b16 %v40
    %v57 = vunpack.c.l.b16 %v41
    %v58 = vunpack.c.l.b16 %v42
    %v59 = vunpack.c.l.b16 %v43
    %v60 = vunpack.c.l.b16 %v44
    %v61 = vpack.c.b16 %v54, %v53
    %v62 = vpack.c.b16 %v56, %v55
    %v63 = vpack.c.b16 %v58, %v57
    %v64 = vpack.c.b16 %v60, %v59
    %vm69 = vcmask 523264
    %v71 = vsel %vm69, %v36, 0
    %73 = vmatpush.bf16.msra.mxu0 0
    %74 = vmatpush.bf16.msra.mxu0 0
    %75 = vmatpush.bf16.msra.mxu0 0
    %76 = vmatpush.bf16.msra.mxu0 0
    %77 = vmatpush.bf16.msra.mxu0 %v64
    %78 = vmatpush.bf16.msra.mxu0 %v63
    %79 = vmatpush.bf16.msra.mxu0 %v62
    %80 = vmatpush.bf16.msra.mxu0 %v61
    %81 = vmatmul.bf16.gmra.mxu0 %v71
    %v82 = vpop.f32.mrf.mxu0
    %v83 = vadd.f32 0.0, %v82
    %v84 = vpop.f32.mrf.mxu0
    %85 = vdwg.mxu0
    %v86 = vld [vmem:[%s2] sm:$0xff]
    %v87 = vmul.f32 %v83, %v86
    %vm88 = vcmask 261120
    %v89 = vsel %vm88, %v87, 0.0
    %90 = vadd.xlane.f32.xlu0 %v89
    %v91 = vpop.xlane.xlu0 %90
    %v92 = vstv %s33
    %v93 = vadd.f32 %v91, %v92
    %vm94 = vcmask 7168
    %95 = vst.msk [vmem:[%s4] sm:$0xff] %vm94, %v93
    %v97 = vrot.slane %v86, 6
    %v99 = vrot.slane %v86, 7
    %vm101 = vcmask 1040384
    %v102 = vsel %vm101, %v97, %v99
    %v103 = vmul.f32 %v83, %v102
    %v104 = vsel %vm88, %v103, 0.0
    %105 = vadd.xlane.f32.xlu0 %v104
    %v106 = vpop.xlane.xlu0 %105
    %v107 = vadd.f32 %v106, %v92
    %vm108 = vcmask 15368
    %109 = vst.msk [vmem:[%s4] sm:$0xff] %vm108, %v107
    %111 = vrot.lane.b32.xlu0 %v87, 96
    %v112 = vpop.permute.xlu0 %111
    %v114 = vsel %vm88, %v112, 0.0
    %115 = vadd.xlane.f32.xlu0 %v114
    %v116 = vpop.xlane.xlu0 %115
    %v117 = vstv %s34
    %v118 = vadd.f32 %v116, %v117
    %119 = vst.msk [vmem:[%s5] sm:$0xff] %vm94, %v118
    %121 = vrot.lane.b32.xlu0 %v103, 96
    %v122 = vpop.permute.xlu0 %121
    %v124 = vsel %vm88, %v122, 0.0
    %125 = vadd.xlane.f32.xlu0 %v124
    %v126 = vpop.xlane.xlu0 %125
    %v127 = vadd.f32 %v126, %v117
    %128 = vst.msk [vmem:[%s5] sm:$0xff] %vm108, %v127
    // Predicated region
    $region22: #{anemone_forward.3} parent=1 // pred_check
      _
    $region23: #{anemone_forward.3} parent=1 // pred_check_branch
      %130 = sbr.rel (0) target = $region25
    $region24: #{anemone_forward.3} parent=1 // pred_region
      _
    $region25: #{anemone_forward.3} parent=1 // pred_fallthru
      _
    // Predicated region
    $region26: #{anemone_forward.3} parent=1 // pred_check
      _
    $region27: #{anemone_forward.3} parent=1 // pred_check_branch
      %132 = sbr.rel (0) target = $region29
    $region28: #{anemone_forward.3} parent=1 // pred_region
      _
    $region29: #{anemone_forward.3} parent=1 // pred_fallthru
      _
    // Predicated region
    $region30: #{anemone_forward.3} parent=1 // pred_check
      _
    $region31: #{anemone_forward.3} parent=1 // pred_check_branch
      %134 = sbr.rel (0) target = $region33
    $region32: #{anemone_forward.3} parent=1 // pred_region
      _
    $region33: #{anemone_forward.3} parent=1 // pred_fallthru
      _
    // Predicated region
    $region34: #{anemone_forward.3} parent=1 // pred_check
      _
    $region35: #{anemone_forward.3} parent=1 // pred_check_branch
      %136 = sbr.rel (0) target = $region37
    $region36: #{anemone_forward.3} parent=1 // pred_region
      _
    $region37: #{anemone_forward.3} parent=1 // pred_fallthru
      _
    %137 = vsyncpa [#allocation3], 1

// kernel: anemone_forward.2
$region0: #{anemone_forward.2}
  #allocation0 [shape = 'u32[]', space=smem, size = 0x4, offset = 0x4, fixed_abs, tag = 'smem constant byte address 0x4 - core index']
  #allocation1 [shape = 'u32[72,128]{1,0:T(1,128)}', space=vmem, size = 0x9000, scoped, tag = 'internal scratch']
  %s0 = inlined_call_operand.vmem [shape: bf16[4,8,16], index: 0, kind: input, shape index: {}]
  %s1 = inlined_call_operand.vmem [shape: bf16[8,16], index: 1, kind: input, shape index: {}]
  %s2 = inlined_call_operand.vmem [shape: bf16[16,64], index: 2, kind: input, shape index: {}]
  %s3 = inlined_call_operand.vmem [shape: f32[1,64], index: 3, kind: input, shape index: {}]
  %s4 = inlined_call_operand.vmem [shape: f32[1,64], index: 4, kind: input, shape index: {}]
  %s5 = inlined_call_operand.vmem [shape: f32[8,64], index: 5, kind: output, shape index: {0}]
  %s6 = inlined_call_operand.vmem [shape: f32[8,64], index: 6, kind: output, shape index: {1}]
  %7 = xla_tuple %s5, %s6
  %s8 = sld [smem:[#allocation0]]
  $region38: #{anemone_forward.2} parent=0
    _
  %s10 = ssub.s32 1, %s8
  %s11 = scalar_select 0, %s10, %s8
  // Predicated region
  $region2: #{anemone_forward.2} parent=0 // pred_check
    _
  $region3: #{anemone_forward.2} parent=0 // pred_check_branch
    %13 = sbr.rel (0) target = $region5
  $region4: #{anemone_forward.2} parent=0 // pred_region
    _
  $region5: #{anemone_forward.2} parent=0 // pred_fallthru
    _
  // Predicated region
  $region6: #{anemone_forward.2} parent=0 // pred_check
    _
  $region7: #{anemone_forward.2} parent=0 // pred_check_branch
    %15 = sbr.rel (0) target = $region9
  $region8: #{anemone_forward.2} parent=0 // pred_region
    _
  $region9: #{anemone_forward.2} parent=0 // pred_fallthru
    _
  // Predicated region
  $region10: #{anemone_forward.2} parent=0 // pred_check
    _
  $region11: #{anemone_forward.2} parent=0 // pred_check_branch
    %17 = sbr.rel (0) target = $region13
  $region12: #{anemone_forward.2} parent=0 // pred_region
    _
  $region13: #{anemone_forward.2} parent=0 // pred_fallthru
    _
  // Predicated region
  $region14: #{anemone_forward.2} parent=0 // pred_check
    _
  $region15: #{anemone_forward.2} parent=0 // pred_check_branch
    %19 = sbr.rel (0) target = $region17
  $region16: #{anemone_forward.2} parent=0 // pred_region
    _
  $region17: #{anemone_forward.2} parent=0 // pred_fallthru
    _
  // Predicated region
  $region18: #{anemone_forward.2} parent=0 // pred_check
    _
  $region19: #{anemone_forward.2} parent=0 // pred_check_branch
    %21 = sbr.rel (0) target = $region21
  $region20: #{anemone_forward.2} parent=0 // pred_region
    _
  $region21: #{anemone_forward.2} parent=0 // pred_fallthru
    _
  %v23 = vld [vmem:[%s0] sm:$0xf]
  %s24 = scalar_lea.vmem %s0, 4
  %v25 = vld [vmem:[%s24] sm:$0xf]
  %s26 = scalar_lea.vmem %s0, 8
  %v27 = vld [vmem:[%s26] sm:$0xf]
  %s28 = scalar_lea.vmem %s0, 12
  %v29 = vld [vmem:[%s28] sm:$0xf]
  %v31 = vunpack.c.l.b16 %v25
  %v32 = vpack.c.b16 %v31, %v31
  %v34 = vunpack.c.l.b16 %v29
  %v35 = vpack.c.b16 %v34, %v34
  %vm36 = vcmask 1043456
  %v39 = vsel %vm36, %v23, %v32
  %v42 = vsel %vm36, %v27, %v35
  %v43 = vld [vmem:[%s2] sm:$0xf]
  %v44 = vld [vmem:[%s2 + $0x4] sm:$0xf]
  %v47 = vunpack.c.l.b16 %v43
  %v48 = vunpack.c.l.b16 %v44
  %v49 = vpack.c.b16 %v48, %v47
  %vm51 = vcmask 130048
  %v52 = vsel %vm51, %v39, 0
  %v54 = vsel %vm51, %v42, 0
  %56 = vmatpush.bf16.msra.mxu0 0
  %57 = vmatpush.bf16.msra.mxu0 0
  %58 = vmatpush.bf16.msra.mxu0 0
  %59 = vmatpush.bf16.msra.mxu0 0
  %60 = vmatpush.bf16.msra.mxu0 0
  %61 = vmatpush.bf16.msra.mxu0 0
  %62 = vmatpush.bf16.msra.mxu0 0
  %63 = vmatpush.bf16.msra.mxu0 %v49
  %64 = vmatmul.bf16.gmra.mxu0 %v52
  %v65 = vpop.f32.mrf.mxu0
  %v66 = vadd.f32 0.0, %v65
  %v67 = vpop.f32.mrf.mxu0
  %v68 = vadd.f32 0.0, %v67
  %69 = vmatmul.bf16.gmra.mxu0 %v54
  %v70 = vpop.f32.mrf.mxu0
  %v71 = vadd.f32 0.0, %v70
  %v72 = vpop.f32.mrf.mxu0
  %v73 = vadd.f32 0.0, %v72
  %74 = vdwg.mxu0
  %v75 = vld [vmem:[%s1] sm:$0xf]
  %v76 = vunpack.c.l.bf16 %v75
  %v77 = vld [vmem:[%s3] sm:$0x1]
  %v79 = vperm.slane %v77, 0
  %v81 = vld [vmem:[%s4] sm:$0x1]
  %v83 = vperm.slane %v81, 0
  %86 = vset.pattern.permute.xlu0 0
  %87 = vperm.xlu0 %86, %v76
  %v88 = vpop.permute.xlu0 %87
  %v90 = vmul.f32 %v88, %v66
  %91 = vset.pattern.permute.xlu0 1
  %92 = vperm.xlu0 %91, %v76
  %v93 = vpop.permute.xlu0 %92
  %v95 = vmul.f32 %v93, %v68
  %v96 = vadd.f32 %v90, %v95
  %97 = vset.pattern.permute.xlu0 2
  %98 = vperm.xlu0 %97, %v76
  %v99 = vpop.permute.xlu0 %98
  %v101 = vmul.f32 %v99, %v71
  %v102 = vadd.f32 %v96, %v101
  %103 = vset.pattern.permute.xlu0 3
  %104 = vperm.xlu0 %103, %v76
  %v105 = vpop.permute.xlu0 %104
  %v107 = vmul.f32 %v105, %v73
  %v108 = vadd.f32 %v102, %v107
  %v109 = vadd.f32 %v108, %v79
  %vm110 = vcmp.gt.f32.partialorder %v109, 0.0
  %v111 = vmul.f32 %v83, %v109
  %v112 = vsel %vm110, %v109, %v111
  %113 = vset.pattern.permute.xlu0 4
  %114 = vperm.xlu0 %113, %v76
  %v115 = vpop.permute.xlu0 %114
  %v117 = vmul.f32 %v115, %v66
  %118 = vset.pattern.permute.xlu0 5
  %119 = vperm.xlu0 %118, %v76
  %v120 = vpop.permute.xlu0 %119
  %v122 = vmul.f32 %v120, %v68
  %v123 = vadd.f32 %v117, %v122
  %124 = vset.pattern.permute.xlu0 6
  %125 = vperm.xlu0 %124, %v76
  %v126 = vpop.permute.xlu0 %125
  %v128 = vmul.f32 %v126, %v71
  %v129 = vadd.f32 %v123, %v128
  %130 = vset.pattern.permute.xlu0 7
  %131 = vperm.xlu0 %130, %v76
  %v132 = vpop.permute.xlu0 %131
  %v134 = vmul.f32 %v132, %v73
  %v135 = vadd.f32 %v129, %v134
  %v136 = vadd.f32 %v135, %v79
  %vm137 = vcmp.gt.f32.partialorder %v136, 0.0
  %v138 = vmul.f32 %v83, %v136
  %v139 = vsel %vm137, %v136, %v138
  %v140 = vadd.f32 %v112, %v139
  %141 = vset.pattern.permute.xlu0 8
  %142 = vperm.xlu0 %141, %v76
  %v143 = vpop.permute.xlu0 %142
  %v145 = vmul.f32 %v143, %v66
  %146 = vset.pattern.permute.xlu0 9
  %147 = vperm.xlu0 %146, %v76
  %v148 = vpop.permute.xlu0 %147
  %v150 = vmul.f32 %v148, %v68
  %v151 = vadd.f32 %v145, %v150
  %152 = vset.pattern.permute.xlu0 10
  %153 = vperm.xlu0 %152, %v76
  %v154 = vpop.permute.xlu0 %153
  %v156 = vmul.f32 %v154, %v71
  %v157 = vadd.f32 %v151, %v156
  %158 = vset.pattern.permute.xlu0 11
  %159 = vperm.xlu0 %158, %v76
  %v160 = vpop.permute.xlu0 %159
  %v162 = vmul.f32 %v160, %v73
  %v163 = vadd.f32 %v157, %v162
  %v164 = vadd.f32 %v163, %v79
  %vm165 = vcmp.gt.f32.partialorder %v164, 0.0
  %v166 = vmul.f32 %v83, %v164
  %v167 = vsel %vm165, %v164, %v166
  %v168 = vadd.f32 %v140, %v167
  %169 = vset.pattern.permute.xlu0 12
  %170 = vperm.xlu0 %169, %v76
  %v171 = vpop.permute.xlu0 %170
  %v173 = vmul.f32 %v171, %v66
  %174 = vset.pattern.permute.xlu0 13
  %175 = vperm.xlu0 %174, %v76
  %v176 = vpop.permute.xlu0 %175
  %v178 = vmul.f32 %v176, %v68
  %v179 = vadd.f32 %v173, %v178
  %180 = vset.pattern.permute.xlu0 14
  %181 = vperm.xlu0 %180, %v76
  %v182 = vpop.permute.xlu0 %181
  %v184 = vmul.f32 %v182, %v71
  %v185 = vadd.f32 %v179, %v184
  %186 = vset.pattern.permute.xlu0 15
  %187 = vperm.xlu0 %186, %v76
  %v188 = vpop.permute.xlu0 %187
  %v190 = vmul.f32 %v188, %v73
  %v191 = vadd.f32 %v185, %v190
  %v192 = vadd.f32 %v191, %v79
  %vm193 = vcmp.gt.f32.partialorder %v192, 0.0
  %v194 = vmul.f32 %v83, %v192
  %v195 = vsel %vm193, %v192, %v194
  %vm196 = vcmask 523264
  %197 = vst.msk [vmem:[%s5] sm:$0xff] %vm196, %v195
  %v198 = vmul.f32 %v168, 0.33333334
  %vm199 = vcmask 261120
  %v200 = vsel %vm199, %v198, %v167
  %201 = vst.msk [vmem:[%s6] sm:$0xff] %vm196, %v200
  // Predicated region
  $region22: #{anemone_forward.2} parent=0 // pred_check
    _
  $region23: #{anemone_forward.2} parent=0 // pred_check_branch
    %203 = sbr.rel (0) target = $region25
  $region24: #{anemone_forward.2} parent=0 // pred_region
    _
  $region25: #{anemone_forward.2} parent=0 // pred_fallthru
    _
  // Predicated region
  $region26: #{anemone_forward.2} parent=0 // pred_check
    _
  $region27: #{anemone_forward.2} parent=0 // pred_check_branch
    %205 = sbr.rel (0) target = $region29
  $region28: #{anemone_forward.2} parent=0 // pred_region
    _
  $region29: #{anemone_forward.2} parent=0 // pred_fallthru
    _
  // Predicated region
  $region30: #{anemone_forward.2} parent=0 // pred_check
    _
  $region31: #{anemone_forward.2} parent=0 // pred_check_branch
    %207 = sbr.rel (0) target = $region33
  $region32: #{anemone_forward.2} parent=0 // pred_region
    _
  $region33: #{anemone_forward.2} parent=0 // pred_fallthru
    _
  // Predicated region
  $region34: #{anemone_forward.2} parent=0 // pred_check
    _
  $region35: #{anemone_forward.2} parent=0 // pred_check_branch
    %209 = sbr.rel (0) target = $region37
  $region36: #{anemone_forward.2} parent=0 // pred_region
    _
  $region37: #{anemone_forward.2} parent=0 // pred_fallthru
    _

</llo_original>
